<compile_context>
chip_gen: v7x
topology: tpu7x:2x2x1
jax: 0.10.0
libtpu: 0.0.40
codegen_flags: <defaults>
</compile_context>

<pallas_src>
import numpy as np
import jax
import jax.numpy as jnp
from jax.experimental import pallas as pl
from jax.experimental.pallas import tpu as pltpu


def backbone_kernel(x_ref, t_ref, w_ref, b_ref, wt_ref, o_ref):
    """One grid step = TB (flattened) batch rows.

    x_ref : VMEM (TB, D)   activations, D = C*HW, channel-major lane layout (io dtype)
    t_ref : VMEM (TB, 1)   time value per batch row (f32)
    w_ref : SMEM (C, C)    1x1-conv weight (c_out, c_in), f32 scalars
    b_ref : SMEM (C,)      bias per output channel, f32
    wt_ref: SMEM (C,)      time-embedding weight per output channel, f32
    o_ref : VMEM (TB, D)   output tile (io dtype)
    """
    C = w_ref.shape[0]
    D = x_ref.shape[-1]
    HW = D // C

    t = t_ref[...]  # (TB, 1), f32

    # Hoisted time/bias epilogue: init each accumulator with t*w_t[co] + bias[co].
    # (Broadcast over HW happens once, on the first FMA add below.)
    accs = [t * wt_ref[co] + b_ref[co] for co in range(C)]        # each (TB, 1)

    # ci-outer loop: each input-channel lane slice is loaded and cast exactly once,
    # then feeds all C output-channel accumulators as scalar-times-vector FMAs.
    for ci in range(C):
        x_ci = x_ref[:, ci * HW:(ci + 1) * HW].astype(jnp.float32)  # lane-dense (TB, HW)
        for co in range(C):
            accs[co] = accs[co] + x_ci * w_ref[co, ci]

    # Single dense full-tile store (slices are 128-lane aligned, so the concat is
    # just vreg placement; per-channel lane-slice stores would also be unmasked).
    o_ref[...] = jnp.concatenate([a.astype(o_ref.dtype) for a in accs], axis=-1)


def _vmem_capacity_bytes():
    try:
        cap = getattr(pltpu.get_tpu_info(), "vmem_capacity_bytes", None)
        if cap:
            return int(cap)
    except Exception:
        pass
    return 128 << 20  # conservative fallback (v5e/v6e-class)


def _choose_batch_tile(bflat, row_bytes, itemsize, vmem_cap_bytes, max_tb=None):
    """Pick TB (rows per block).  Prefers exact divisors of bflat (balanced grid,
    no ragged tail); otherwise a multiple-of-sublane TB with a cdiv ragged tail.
    On 2-TC (64 MiB VMEM) parts, keeps >=2 grid steps so both TensorCores get work."""
    two_tc = vmem_cap_bytes <= (64 << 20)            # v7x-class
    target = (2 << 20) if two_tc else (6 << 20)      # io-tile bytes per block
    sub = 8 * max(1, 4 // max(1, itemsize))          # 8 for f32, 16 for bf16 packing

    tb = max(1, target // max(1, row_bytes))
    if max_tb is not None:
        tb = min(tb, int(max_tb))
    if two_tc and bflat >= 2:
        tb = min(tb, -(-bflat // 2))                 # >= 2 grid steps (megacore split)
    if tb >= bflat:
        return bflat                                 # single full block
    tb = max(sub, (tb // sub) * sub)
    if tb >= bflat:
        return bflat
    # Prefer an exact divisor near tb (down to ~tb/2): extra grid steps cost only
    # ~0.35 us each, far cheaper than padding x in HBM.
    for cand in range(tb, max(tb // 2, sub) - 1, -sub):
        if bflat % cand == 0:
            return cand
    return tb                                        # ragged tail via cdiv grid


def backbone_pallas(x, t, w, bias, w_t, *, max_batch_tile=None):
    """x: (Bflat, D) in io dtype (f32 or bf16), channel-major last dim (C blocks of HW).
    t: (Bflat,).  Returns y: (Bflat, D) in io dtype."""
    bflat, d = x.shape
    io_dtype = x.dtype
    itemsize = jnp.dtype(io_dtype).itemsize

    vmem_cap = _vmem_capacity_bytes()
    tb = _choose_batch_tile(bflat, d * itemsize, itemsize, vmem_cap, max_batch_tile)
    grid = (pl.cdiv(bflat, tb),)                     # no jnp.pad of x: partial last block

    t2 = t.astype(jnp.float32).reshape(bflat, 1)
    w32 = w.astype(jnp.float32)
    b32 = bias.astype(jnp.float32)
    wt32 = w_t.astype(jnp.float32)

    # VMEM budget: double-buffered in+out io tiles + f32 accumulators/slice + slack.
    tile_io = tb * d * itemsize
    tile_f32 = tb * d * 4
    cap = (40 << 20) if vmem_cap <= (64 << 20) else min(96 << 20, (3 * vmem_cap) // 4)
    vmem_limit = int(min(max(4 * tile_io + 2 * tile_f32 + (4 << 20), 32 << 20), cap))

    return pl.pallas_call(
        backbone_kernel,
        out_shape=jax.ShapeDtypeStruct((bflat, d), io_dtype),
        grid=grid,
        in_specs=[
            pl.BlockSpec((tb, d), lambda b: (b, 0)),                # x   (lane-dense)
            pl.BlockSpec((tb, 1), lambda b: (b, 0)),                # t
            pl.BlockSpec(memory_space=pltpu.MemorySpace.SMEM),      # W    (C, C)
            pl.BlockSpec(memory_space=pltpu.MemorySpace.SMEM),      # bias (C,)
            pl.BlockSpec(memory_space=pltpu.MemorySpace.SMEM),      # w_t  (C,)
        ],
        out_specs=pl.BlockSpec((tb, d), lambda b: (b, 0)),
        compiler_params=pltpu.CompilerParams(
            dimension_semantics=("parallel",),       # batch axis: megacore on v7x
            vmem_limit_bytes=vmem_limit,
        ),
    )(x, t2, w32, b32, wt32)


def flatten_wrapper_forward(x_t, t, shape, params, io_dtype=None, max_batch_tile=None):
    """Mirrors FlattenWrapper.forward for a single-tensor wrappee.

    x_t: (*, D); t broadcastable (trailing-aligned, == torch left-unsqueeze) to (*).
    io_dtype (e.g. jnp.bfloat16) controls activation dtype for HBM<->VMEM traffic;
    accumulation is always f32."""
    shape = tuple(shape)
    c = shape[0]
    hw = int(np.prod(shape[1:])) if len(shape) > 1 else 1
    *batch, d = x_t.shape
    assert d == c * hw, "last dim must equal prod(shape)"
    bflat = int(np.prod(batch)) if batch else 1

    # Flatten/unflatten glue is free in JAX: the kernel addresses channels as lane
    # slices of the contiguous last dim, so no (B, C, HW) reshape is materialized.
    # TODO(synk): for HW not a multiple of 128 (unaligned lane slices) or HW == 1,
    # a 3-D sublane-broadcast formulation would be preferable.
    x = x_t.reshape(bflat, d)
    if io_dtype is not None and x.dtype != io_dtype:
        x = x.astype(io_dtype)

    # `while t.ndim < len(batch): t = t.unsqueeze(0)` == trailing-aligned broadcast.
    t_b = jnp.broadcast_to(jnp.asarray(t, jnp.float32), tuple(batch)).reshape(bflat)

    y = backbone_pallas(x, t_b, params["w"], params["bias"], params["w_t"],
                        max_batch_tile=max_batch_tile)

    # y.flatten(-len(shape)) and restore leading batch dims.
    # TODO(synk): the list-output branch of FlattenWrapper.forward (wrappee returning
    # multiple tensors) is not exercised by this single-tensor synthetic wrappee.
    return y.reshape(*batch, d)


def reference_forward(x_t, t, shape, params):
    """Pure-JAX reference of the same wrapped backbone (f32 math)."""
    shape = tuple(shape)
    c = shape[0]
    hw = int(np.prod(shape[1:])) if len(shape) > 1 else 1
    *batch, d = x_t.shape
    bflat = int(np.prod(batch)) if batch else 1
    x = x_t.reshape(bflat, c, hw).astype(jnp.float32)
    t_b = jnp.broadcast_to(jnp.asarray(t, jnp.float32), tuple(batch)).reshape(bflat)
    y = (jnp.einsum("oc,bcs->bos", params["w"].astype(jnp.float32), x)
         + params["bias"].astype(jnp.float32)[None, :, None]
         + t_b[:, None, None] * params["w_t"].astype(jnp.float32)[None, :, None])
    return y.reshape(*batch, d)


if __name__ == "__main__":
    C, H, W = 4, 16, 16
    D = C * H * W
    shape = (C, H, W)

    key = jax.random.PRNGKey(0)
    k_x, k_t, k_w, k_b, k_wt, k_x2, k_t2, k_x3, k_t3 = jax.random.split(key, 9)

    params = {
        "w": jax.random.normal(k_w, (C, C), dtype=jnp.float32) * 0.1,
        "bias": jax.random.normal(k_b, (C,), dtype=jnp.float32) * 0.1,
        "w_t": jax.random.normal(k_wt, (C,), dtype=jnp.float32) * 0.1,
    }

    # Case 1: simple batch, f32 end-to-end (tight tolerance), single full block.
    B = 2
    x_t = jax.random.normal(k_x, (B, D), dtype=jnp.float32)          # (*, D)
    t = jax.random.uniform(k_t, (B,), dtype=jnp.float32)             # (*)
    out = jax.block_until_ready(flatten_wrapper_forward(x_t, t, shape, params))
    assert out.shape == (B, D) and out.dtype == jnp.float32
    ref = reference_forward(x_t, t, shape, params)
    np.testing.assert_allclose(np.asarray(out, np.float32), np.asarray(ref),
                               rtol=1e-5, atol=1e-5)

    # Case 2: multi-dim batch + broadcast t (t.ndim < len(batch)) + bf16 I/O
    # (halved HBM traffic, f32 accumulation inside the kernel).
    B2 = (4, 3)
    x_t2 = jax.random.normal(k_x2, (*B2, D), dtype=jnp.float32)
    t2 = jax.random.uniform(k_t2, (B2[-1],), dtype=jnp.float32)
    out2 = jax.block_until_ready(
        flatten_wrapper_forward(x_t2, t2, shape, params, io_dtype=jnp.bfloat16))
    assert out2.shape == (*B2, D) and out2.dtype == jnp.bfloat16
    ref2 = reference_forward(x_t2, t2, shape, params)
    np.testing.assert_allclose(np.asarray(out2.astype(jnp.float32)),
                               np.asarray(ref2), rtol=5e-2, atol=5e-2)

    # Case 3: forced small batch tile -> multi-step grid with a ragged (partial)
    # last block, exercising the no-pad cdiv-grid path.
    B3 = (4, 5)
    x_t3 = jax.random.normal(k_x3, (*B3, D), dtype=jnp.float32)
    t3 = jax.random.uniform(k_t3, B3, dtype=jnp.float32)
    out3 = jax.block_until_ready(
        flatten_wrapper_forward(x_t3, t3, shape, params, max_batch_tile=8))
    assert out3.shape == (*B3, D) and out3.dtype == jnp.float32
    ref3 = reference_forward(x_t3, t3, shape, params)
    np.testing.assert_allclose(np.asarray(out3, np.float32), np.asarray(ref3),
                               rtol=1e-5, atol=1e-5)

    print("KERNEL_OK")
</pallas_src>

<mosaic_0001>
module attributes {stable_mosaic.version = 11 : i64} {
  func.func @backbone_kernel(%arg0: i32, %arg1: memref<2x1024xf32, #tpu.memory_space<vmem>>, %arg2: memref<2x1xf32, #tpu.memory_space<vmem>>, %arg3: memref<4x4xf32, #tpu.memory_space<smem>>, %arg4: memref<4xf32, #tpu.memory_space<smem>>, %arg5: memref<4xf32, #tpu.memory_space<smem>>, %arg6: memref<2x1024xf32, #tpu.memory_space<vmem>>) attributes {dimension_semantics = [#tpu.dimension_semantics<parallel>], iteration_bounds = array<i64: 1>, scalar_prefetch = 0 : i64, scratch_operands = 0 : i64, tpu.core_type = #tpu.core_type<tc>, window_params = [{transform_indices = @transform_0, window_bounds = array<i64: 2, 1024>}, {transform_indices = @transform_1, window_bounds = array<i64: 2, 1>}, {transform_indices = @transform_2, window_bounds = array<i64: 4, 4>}, {transform_indices = @transform_3, window_bounds = array<i64: 4>}, {transform_indices = @transform_4, window_bounds = array<i64: 4>}, {transform_indices = @transform_5, window_bounds = array<i64: 2, 1024>}]} {
    %c0 = arith.constant 0 : index
    %c0_0 = arith.constant 0 : index
    %0 = vector.load %arg2[%c0, %c0_0] : memref<2x1xf32, #tpu.memory_space<vmem>>, vector<2x1xf32>
    %c0_1 = arith.constant 0 : index
    %1 = memref.load %arg5[%c0_1] : memref<4xf32, #tpu.memory_space<smem>>
    %2 = vector.broadcast %1 : f32 to vector<2x1xf32>
    %3 = arith.mulf %0, %2 : vector<2x1xf32>
    %c0_2 = arith.constant 0 : index
    %4 = memref.load %arg4[%c0_2] : memref<4xf32, #tpu.memory_space<smem>>
    %5 = vector.broadcast %4 : f32 to vector<2x1xf32>
    %6 = arith.addf %3, %5 : vector<2x1xf32>
    %c1 = arith.constant 1 : index
    %7 = memref.load %arg5[%c1] : memref<4xf32, #tpu.memory_space<smem>>
    %8 = vector.broadcast %7 : f32 to vector<2x1xf32>
    %9 = arith.mulf %0, %8 : vector<2x1xf32>
    %c1_3 = arith.constant 1 : index
    %10 = memref.load %arg4[%c1_3] : memref<4xf32, #tpu.memory_space<smem>>
    %11 = vector.broadcast %10 : f32 to vector<2x1xf32>
    %12 = arith.addf %9, %11 : vector<2x1xf32>
    %c2 = arith.constant 2 : index
    %13 = memref.load %arg5[%c2] : memref<4xf32, #tpu.memory_space<smem>>
    %14 = vector.broadcast %13 : f32 to vector<2x1xf32>
    %15 = arith.mulf %0, %14 : vector<2x1xf32>
    %c2_4 = arith.constant 2 : index
    %16 = memref.load %arg4[%c2_4] : memref<4xf32, #tpu.memory_space<smem>>
    %17 = vector.broadcast %16 : f32 to vector<2x1xf32>
    %18 = arith.addf %15, %17 : vector<2x1xf32>
    %c3 = arith.constant 3 : index
    %19 = memref.load %arg5[%c3] : memref<4xf32, #tpu.memory_space<smem>>
    %20 = vector.broadcast %19 : f32 to vector<2x1xf32>
    %21 = arith.mulf %0, %20 : vector<2x1xf32>
    %c3_5 = arith.constant 3 : index
    %22 = memref.load %arg4[%c3_5] : memref<4xf32, #tpu.memory_space<smem>>
    %23 = vector.broadcast %22 : f32 to vector<2x1xf32>
    %24 = arith.addf %21, %23 : vector<2x1xf32>
    %c0_6 = arith.constant 0 : index
    %c0_7 = arith.constant 0 : index
    %25 = vector.load %arg1[%c0_6, %c0_7] : memref<2x1024xf32, #tpu.memory_space<vmem>>, vector<2x256xf32>
    %c0_8 = arith.constant 0 : index
    %c0_9 = arith.constant 0 : index
    %26 = memref.load %arg3[%c0_8, %c0_9] : memref<4x4xf32, #tpu.memory_space<smem>>
    %27 = vector.broadcast %26 : f32 to vector<2x256xf32>
    %28 = arith.mulf %25, %27 : vector<2x256xf32>
    %29 = vector.broadcast %6 : vector<2x1xf32> to vector<2x256xf32>
    %30 = arith.addf %29, %28 : vector<2x256xf32>
    %c1_10 = arith.constant 1 : index
    %c0_11 = arith.constant 0 : index
    %31 = memref.load %arg3[%c1_10, %c0_11] : memref<4x4xf32, #tpu.memory_space<smem>>
    %32 = vector.broadcast %31 : f32 to vector<2x256xf32>
    %33 = arith.mulf %25, %32 : vector<2x256xf32>
    %34 = vector.broadcast %12 : vector<2x1xf32> to vector<2x256xf32>
    %35 = arith.addf %34, %33 : vector<2x256xf32>
    %c2_12 = arith.constant 2 : index
    %c0_13 = arith.constant 0 : index
    %36 = memref.load %arg3[%c2_12, %c0_13] : memref<4x4xf32, #tpu.memory_space<smem>>
    %37 = vector.broadcast %36 : f32 to vector<2x256xf32>
    %38 = arith.mulf %25, %37 : vector<2x256xf32>
    %39 = vector.broadcast %18 : vector<2x1xf32> to vector<2x256xf32>
    %40 = arith.addf %39, %38 : vector<2x256xf32>
    %c3_14 = arith.constant 3 : index
    %c0_15 = arith.constant 0 : index
    %41 = memref.load %arg3[%c3_14, %c0_15] : memref<4x4xf32, #tpu.memory_space<smem>>
    %42 = vector.broadcast %41 : f32 to vector<2x256xf32>
    %43 = arith.mulf %25, %42 : vector<2x256xf32>
    %44 = vector.broadcast %24 : vector<2x1xf32> to vector<2x256xf32>
    %45 = arith.addf %44, %43 : vector<2x256xf32>
    %c0_16 = arith.constant 0 : index
    %c256 = arith.constant 256 : index
    %46 = vector.load %arg1[%c0_16, %c256] : memref<2x1024xf32, #tpu.memory_space<vmem>>, vector<2x256xf32>
    %c0_17 = arith.constant 0 : index
    %c1_18 = arith.constant 1 : index
    %47 = memref.load %arg3[%c0_17, %c1_18] : memref<4x4xf32, #tpu.memory_space<smem>>
    %48 = vector.broadcast %47 : f32 to vector<2x256xf32>
    %49 = arith.mulf %46, %48 : vector<2x256xf32>
    %50 = arith.addf %30, %49 : vector<2x256xf32>
    %c1_19 = arith.constant 1 : index
    %c1_20 = arith.constant 1 : index
    %51 = memref.load %arg3[%c1_19, %c1_20] : memref<4x4xf32, #tpu.memory_space<smem>>
    %52 = vector.broadcast %51 : f32 to vector<2x256xf32>
    %53 = arith.mulf %46, %52 : vector<2x256xf32>
    %54 = arith.addf %35, %53 : vector<2x256xf32>
    %c2_21 = arith.constant 2 : index
    %c1_22 = arith.constant 1 : index
    %55 = memref.load %arg3[%c2_21, %c1_22] : memref<4x4xf32, #tpu.memory_space<smem>>
    %56 = vector.broadcast %55 : f32 to vector<2x256xf32>
    %57 = arith.mulf %46, %56 : vector<2x256xf32>
    %58 = arith.addf %40, %57 : vector<2x256xf32>
    %c3_23 = arith.constant 3 : index
    %c1_24 = arith.constant 1 : index
    %59 = memref.load %arg3[%c3_23, %c1_24] : memref<4x4xf32, #tpu.memory_space<smem>>
    %60 = vector.broadcast %59 : f32 to vector<2x256xf32>
    %61 = arith.mulf %46, %60 : vector<2x256xf32>
    %62 = arith.addf %45, %61 : vector<2x256xf32>
    %c0_25 = arith.constant 0 : index
    %c512 = arith.constant 512 : index
    %63 = vector.load %arg1[%c0_25, %c512] : memref<2x1024xf32, #tpu.memory_space<vmem>>, vector<2x256xf32>
    %c0_26 = arith.constant 0 : index
    %c2_27 = arith.constant 2 : index
    %64 = memref.load %arg3[%c0_26, %c2_27] : memref<4x4xf32, #tpu.memory_space<smem>>
    %65 = vector.broadcast %64 : f32 to vector<2x256xf32>
    %66 = arith.mulf %63, %65 : vector<2x256xf32>
    %67 = arith.addf %50, %66 : vector<2x256xf32>
    %c1_28 = arith.constant 1 : index
    %c2_29 = arith.constant 2 : index
    %68 = memref.load %arg3[%c1_28, %c2_29] : memref<4x4xf32, #tpu.memory_space<smem>>
    %69 = vector.broadcast %68 : f32 to vector<2x256xf32>
    %70 = arith.mulf %63, %69 : vector<2x256xf32>
    %71 = arith.addf %54, %70 : vector<2x256xf32>
    %c2_30 = arith.constant 2 : index
    %c2_31 = arith.constant 2 : index
    %72 = memref.load %arg3[%c2_30, %c2_31] : memref<4x4xf32, #tpu.memory_space<smem>>
    %73 = vector.broadcast %72 : f32 to vector<2x256xf32>
    %74 = arith.mulf %63, %73 : vector<2x256xf32>
    %75 = arith.addf %58, %74 : vector<2x256xf32>
    %c3_32 = arith.constant 3 : index
    %c2_33 = arith.constant 2 : index
    %76 = memref.load %arg3[%c3_32, %c2_33] : memref<4x4xf32, #tpu.memory_space<smem>>
    %77 = vector.broadcast %76 : f32 to vector<2x256xf32>
    %78 = arith.mulf %63, %77 : vector<2x256xf32>
    %79 = arith.addf %62, %78 : vector<2x256xf32>
    %c0_34 = arith.constant 0 : index
    %c768 = arith.constant 768 : index
    %80 = vector.load %arg1[%c0_34, %c768] : memref<2x1024xf32, #tpu.memory_space<vmem>>, vector<2x256xf32>
    %c0_35 = arith.constant 0 : index
    %c3_36 = arith.constant 3 : index
    %81 = memref.load %arg3[%c0_35, %c3_36] : memref<4x4xf32, #tpu.memory_space<smem>>
    %82 = vector.broadcast %81 : f32 to vector<2x256xf32>
    %83 = arith.mulf %80, %82 : vector<2x256xf32>
    %84 = arith.addf %67, %83 : vector<2x256xf32>
    %c1_37 = arith.constant 1 : index
    %c3_38 = arith.constant 3 : index
    %85 = memref.load %arg3[%c1_37, %c3_38] : memref<4x4xf32, #tpu.memory_space<smem>>
    %86 = vector.broadcast %85 : f32 to vector<2x256xf32>
    %87 = arith.mulf %80, %86 : vector<2x256xf32>
    %88 = arith.addf %71, %87 : vector<2x256xf32>
    %c2_39 = arith.constant 2 : index
    %c3_40 = arith.constant 3 : index
    %89 = memref.load %arg3[%c2_39, %c3_40] : memref<4x4xf32, #tpu.memory_space<smem>>
    %90 = vector.broadcast %89 : f32 to vector<2x256xf32>
    %91 = arith.mulf %80, %90 : vector<2x256xf32>
    %92 = arith.addf %75, %91 : vector<2x256xf32>
    %c3_41 = arith.constant 3 : index
    %c3_42 = arith.constant 3 : index
    %93 = memref.load %arg3[%c3_41, %c3_42] : memref<4x4xf32, #tpu.memory_space<smem>>
    %94 = vector.broadcast %93 : f32 to vector<2x256xf32>
    %95 = arith.mulf %80, %94 : vector<2x256xf32>
    %96 = arith.addf %79, %95 : vector<2x256xf32>
    %97 = tpu.concatenate %84, %88, %92, %96 in 1 : vector<2x256xf32>, vector<2x256xf32>, vector<2x256xf32>, vector<2x256xf32> -> vector<2x1024xf32>
    %c0_43 = arith.constant 0 : index
    %c0_44 = arith.constant 0 : index
    %98 = vector.load %arg6[%c0_43, %c0_44] : memref<2x1024xf32, #tpu.memory_space<vmem>>, vector<2x1024xf32>
    tpu.vector_store %arg6[%c0_43, %c0_44], %97 {strides = array<i32>} : memref<2x1024xf32, #tpu.memory_space<vmem>>, vector<2x1024xf32>,
    return
  }
  func.func @transform_0(%arg0: i32) -> (i32, i32) {
    %c0_i32 = arith.constant 0 : i32
    %c0_i32_0 = arith.constant 0 : i32
    return %arg0, %c0_i32 : i32, i32
  }
  func.func @transform_1(%arg0: i32) -> (i32, i32) {
    %c0_i32 = arith.constant 0 : i32
    %c0_i32_0 = arith.constant 0 : i32
    return %arg0, %c0_i32 : i32, i32
  }
  func.func @transform_2(%arg0: i32) -> (i32, i32) {
    %c0_i32 = arith.constant 0 : i32
    %c0_i32_0 = arith.constant 0 : i32
    %c0_i32_1 = arith.constant 0 : i32
    return %c0_i32, %c0_i32_0 : i32, i32
  }
  func.func @transform_3(%arg0: i32) -> i32 {
    %c0_i32 = arith.constant 0 : i32
    %c0_i32_0 = arith.constant 0 : i32
    return %c0_i32 : i32
  }
  func.func @transform_4(%arg0: i32) -> i32 {
    %c0_i32 = arith.constant 0 : i32
    %c0_i32_0 = arith.constant 0 : i32
    return %c0_i32 : i32
  }
  func.func @transform_5(%arg0: i32) -> (i32, i32) {
    %c0_i32 = arith.constant 0 : i32
    %c0_i32_0 = arith.constant 0 : i32
    return %arg0, %c0_i32 : i32, i32
  }
}

</mosaic_0001>

<llo_original>
// kernel: tpu_custom_call.1
$region0: #{tpu_custom_call.1}
  #allocation0 [shape = 'u32[]', space=smem, size = 0x4, offset = 0x4, fixed_abs, tag = 'smem constant byte address 0x4 - core index']
  #allocation1 [shape = 'u32[144,128]{1,0:T(1,128)}', space=vmem, size = 0x12000, scoped, tag = 'internal scratch']
  %s0 = inlined_call_operand.hbm [shape: f32[2,1024], index: 0, kind: input, shape index: {}]
  %s1 = inlined_call_operand.vmem [shape: f32[2,1], index: 1, kind: input, shape index: {}]
  %s2 = inlined_call_operand.vmem [shape: f32[4,4], index: 2, kind: input, shape index: {}]
  %s3 = inlined_call_operand.vmem [shape: f32[4], index: 3, kind: input, shape index: {}]
  %s4 = inlined_call_operand.vmem [shape: f32[4], index: 4, kind: input, shape index: {}]
  %s5 = inlined_call_operand.hbm [shape: f32[2,1024], index: 5, kind: output, shape index: {}]
  %s6 = sld [smem:[#allocation0]]
  $region46: #{tpu_custom_call.1} parent=0
    _
  %s8 = ssub.s32 1, %s6
  %s9 = scalar_select 0, %s8, %s6
  $region1: #{tpu_custom_call.1} parent=0
    #allocation2 [shape = 'u8[8192]{0}', space=vmem, size = 0x2000, scoped, tag = 'input window, operand 0, single buffered']
    #allocation3 [shape = 's32[1]{0}', space=sflag, size = 0x4, scoped, tag = 'scoped memory for tpu_custom_call.1']
    #allocation4 [shape = 's32[1]{0}', space=sflag, size = 0x4, scoped, tag = 'scoped memory for tpu_custom_call.1']
    #allocation5 [shape = 's32[1]{0}', space=sflag, size = 0x4, scoped, tag = 'scoped memory for tpu_custom_call.1']
    #allocation6 [shape = 'u8[2048]{0}', space=smem, size = 0x800, scoped, tag = 'input window, operand 2, single buffered']
    #allocation7 [shape = 'u8[512]{0}', space=smem, size = 0x200, scoped, tag = 'input window, operand 3, single buffered']
    #allocation8 [shape = 's32[1]{0}', space=sflag, size = 0x4, scoped, tag = 'scoped memory for tpu_custom_call.1']
    #allocation9 [shape = 'u8[512]{0}', space=smem, size = 0x200, scoped, tag = 'input window, operand 4, single buffered']
    #allocation10 [shape = 'u8[8192]{0}', space=vmem, size = 0x2000, scoped, tag = 'output window, operand 0, single buffered']
    %10 = vsyncpa [#allocation3], 0
    %11 = vsyncpa [#allocation5], 0
    %12 = vsyncpa [#allocation8], 0
    %13 = vsyncpa [#allocation4], 0
    // Predicated region
    $region2: #{tpu_custom_call.1} parent=1 // pred_check
      _
    $region3: #{tpu_custom_call.1} parent=1 // pred_check_branch
      %15 = sbr.rel (0) target = $region5
    $region4: #{tpu_custom_call.1} parent=1 // pred_region
      %s17 = ssub.s32 256, 256
      %18 = vsyncadd [#allocation3], %s17
      %s20 = sshll.u32 [#allocation2], 4
      %s21 = int_to_ptr.vmem [resolvable:$true] %s20
      %23 = dma.hbm_to_vmem [thread:$0]  %s0, 256, %s21, [#allocation3]
    $region5: #{tpu_custom_call.1} parent=1 // pred_fallthru
      _
    // Predicated region
    $region6: #{tpu_custom_call.1} parent=1 // pred_check
      _
    $region7: #{tpu_custom_call.1} parent=1 // pred_check_branch
      %25 = sbr.rel (0) target = $region9
    $region8: #{tpu_custom_call.1} parent=1 // pred_region
      _
    $region9: #{tpu_custom_call.1} parent=1 // pred_fallthru
      _
    // Predicated region
    $region10: #{tpu_custom_call.1} parent=1 // pred_check
      _
    $region11: #{tpu_custom_call.1} parent=1 // pred_check_branch
      %27 = sbr.rel (0) target = $region13
    $region12: #{tpu_custom_call.1} parent=1 // pred_region
      %s29 = ssub.s32 64, 64
      %30 = vsyncadd [#allocation5], %s29
      %s32 = sshll.u32 %s2, 4
      %s33 = int_to_ptr.vmem [resolvable:$true] %s32
      %35 = dma.vmem_to_smem %s33, 64, [#allocation6], [#allocation5]
    $region13: #{tpu_custom_call.1} parent=1 // pred_fallthru
      _
    // Predicated region
    $region14: #{tpu_custom_call.1} parent=1 // pred_check
      _
    $region15: #{tpu_custom_call.1} parent=1 // pred_check_branch
      %37 = sbr.rel (0) target = $region17
    $region16: #{tpu_custom_call.1} parent=1 // pred_region
      %s39 = ssub.s32 16, 16
      %40 = vsyncadd [#allocation8], %s39
      %s42 = sshll.u32 %s3, 4
      %s43 = int_to_ptr.vmem [resolvable:$true] %s42
      %45 = dma.vmem_to_smem %s43, 16, [#allocation7], [#allocation8]
    $region17: #{tpu_custom_call.1} parent=1 // pred_fallthru
      _
    // Predicated region
    $region18: #{tpu_custom_call.1} parent=1 // pred_check
      _
    $region19: #{tpu_custom_call.1} parent=1 // pred_check_branch
      %47 = sbr.rel (0) target = $region21
    $region20: #{tpu_custom_call.1} parent=1 // pred_region
      %s49 = ssub.s32 16, 16
      %50 = vsyncadd [#allocation8], %s49
      %s52 = sshll.u32 %s4, 4
      %s53 = int_to_ptr.vmem [resolvable:$true] %s52
      %55 = dma.vmem_to_smem %s53, 16, [#allocation9], [#allocation8]
    $region21: #{tpu_custom_call.1} parent=1 // pred_fallthru
      _
    // Predicated region
    $region22: #{tpu_custom_call.1} parent=1 // pred_check
      _
    $region23: #{tpu_custom_call.1} parent=1 // pred_check_branch
      %57 = sbr.rel (0) target = $region25
    $region24: #{tpu_custom_call.1} parent=1 // pred_region
      %58 = dma.done [#allocation3], 256
    $region25: #{tpu_custom_call.1} parent=1 // pred_fallthru
      _
    // Predicated region
    $region26: #{tpu_custom_call.1} parent=1 // pred_check
      _
    $region27: #{tpu_custom_call.1} parent=1 // pred_check_branch
      %60 = sbr.rel (0) target = $region29
    $region28: #{tpu_custom_call.1} parent=1 // pred_region
      %61 = dma.done [#allocation5], 64
    $region29: #{tpu_custom_call.1} parent=1 // pred_fallthru
      _
    // Predicated region
    $region30: #{tpu_custom_call.1} parent=1 // pred_check
      _
    $region31: #{tpu_custom_call.1} parent=1 // pred_check_branch
      %63 = sbr.rel (0) target = $region33
    $region32: #{tpu_custom_call.1} parent=1 // pred_region
      %64 = dma.done [#allocation8], 16
    $region33: #{tpu_custom_call.1} parent=1 // pred_fallthru
      _
    // Predicated region
    $region34: #{tpu_custom_call.1} parent=1 // pred_check
      _
    $region35: #{tpu_custom_call.1} parent=1 // pred_check_branch
      %66 = sbr.rel (0) target = $region37
    $region36: #{tpu_custom_call.1} parent=1 // pred_region
      %67 = dma.done [#allocation8], 16
    $region37: #{tpu_custom_call.1} parent=1 // pred_fallthru
      _
    %68 = sfence
    %v69 = vld [vmem:[%s1] sm:$0x3]
    %s70 = sld [smem:[#allocation9]]
    %v71 = vstv %s70
    %v72 = vmul.f32 %v69, %v71
    %s73 = sld [smem:[#allocation7]]
    %v74 = vstv %s73
    %v75 = vadd.f32 %v72, %v74
    %s76 = sld [smem:[#allocation9 + $0x1]]
    %v77 = vstv %s76
    %v78 = vmul.f32 %v69, %v77
    %s79 = sld [smem:[#allocation7 + $0x1]]
    %v80 = vstv %s79
    %v81 = vadd.f32 %v78, %v80
    %s82 = sld [smem:[#allocation9 + $0x2]]
    %v83 = vstv %s82
    %v84 = vmul.f32 %v69, %v83
    %s85 = sld [smem:[#allocation7 + $0x2]]
    %v86 = vstv %s85
    %v87 = vadd.f32 %v84, %v86
    %s88 = sld [smem:[#allocation9 + $0x3]]
    %v89 = vstv %s88
    %v90 = vmul.f32 %v69, %v89
    %s91 = sld [smem:[#allocation7 + $0x3]]
    %v92 = vstv %s91
    %v93 = vadd.f32 %v90, %v92
    %v94 = vld [vmem:[#allocation2] sm:$0xf]
    %s95 = sld [smem:[#allocation6]]
    %v96 = vstv %s95
    %v97 = vmul.f32 %v94, %v96
    %99 = vset.pattern.permute.xlu0 0
    %100 = vperm.xlu0 %99, %v75
    %v101 = vpop.permute.xlu0 %100
    %v105 = vunpack.c.l.s4 1983009808
    %v106 = vunpack.c.0.s8 %v105
    %v107 = vlaneseq
    %v108 = vshrl.u32 %v107, 7
    %v109 = vsub.s32 %v106, %v108
    %v110 = vrot.slane %v97, %v109
    %v111 = vcombine.high %v110, %v110
    %v114 = vadd.f32 %v101, %v110
    %v115 = vadd.f32 %v101, %v111
    %s116 = sld [smem:[#allocation6 + $0x80]]
    %v117 = vstv %s116
    %v118 = vmul.f32 %v94, %v117
    %120 = vset.pattern.permute.xlu0 0
    %121 = vperm.xlu0 %120, %v81
    %v122 = vpop.permute.xlu0 %121
    %v126 = vunpack.c.l.s4 1983009808
    %v127 = vunpack.c.0.s8 %v126
    %v128 = vlaneseq
    %v129 = vshrl.u32 %v128, 7
    %v130 = vsub.s32 %v127, %v129
    %v131 = vrot.slane %v118, %v130
    %v132 = vcombine.high %v131, %v131
    %v135 = vadd.f32 %v122, %v131
    %v136 = vadd.f32 %v122, %v132
    %s137 = sld [smem:[#allocation6 + $0x100]]
    %v138 = vstv %s137
    %v139 = vmul.f32 %v94, %v138
    %141 = vset.pattern.permute.xlu0 0
    %142 = vperm.xlu0 %141, %v87
    %v143 = vpop.permute.xlu0 %142
    %v147 = vunpack.c.l.s4 1983009808
    %v148 = vunpack.c.0.s8 %v147
    %v149 = vlaneseq
    %v150 = vshrl.u32 %v149, 7
    %v151 = vsub.s32 %v148, %v150
    %v152 = vrot.slane %v139, %v151
    %v153 = vcombine.high %v152, %v152
    %v156 = vadd.f32 %v143, %v152
    %v157 = vadd.f32 %v143, %v153
    %s158 = sld [smem:[#allocation6 + $0x180]]
    %v159 = vstv %s158
    %v160 = vmul.f32 %v94, %v159
    %162 = vset.pattern.permute.xlu0 0
    %163 = vperm.xlu0 %162, %v93
    %v164 = vpop.permute.xlu0 %163
    %v168 = vunpack.c.l.s4 1983009808
    %v169 = vunpack.c.0.s8 %v168
    %v170 = vlaneseq
    %v171 = vshrl.u32 %v170, 7
    %v172 = vsub.s32 %v169, %v171
    %v173 = vrot.slane %v160, %v172
    %v174 = vcombine.high %v173, %v173
    %v177 = vadd.f32 %v164, %v173
    %v178 = vadd.f32 %v164, %v174
    %v179 = vld [vmem:[#allocation2 + $0x4] sm:$0xf]
    %s180 = sld [smem:[#allocation6 + $0x1]]
    %v181 = vstv %s180
    %v182 = vmul.f32 %v179, %v181
    %v185 = vunpack.c.l.s4 1983009808
    %v186 = vunpack.c.0.s8 %v185
    %v187 = vlaneseq
    %v188 = vshrl.u32 %v187, 7
    %v189 = vsub.s32 %v186, %v188
    %v190 = vrot.slane %v182, %v189
    %v191 = vcombine.high %v190, %v190
    %v194 = vadd.f32 %v114, %v190
    %v195 = vadd.f32 %v115, %v191
    %s196 = sld [smem:[#allocation6 + $0x81]]
    %v197 = vstv %s196
    %v198 = vmul.f32 %v179, %v197
    %v201 = vunpack.c.l.s4 1983009808
    %v202 = vunpack.c.0.s8 %v201
    %v203 = vlaneseq
    %v204 = vshrl.u32 %v203, 7
    %v205 = vsub.s32 %v202, %v204
    %v206 = vrot.slane %v198, %v205
    %v207 = vcombine.high %v206, %v206
    %v210 = vadd.f32 %v135, %v206
    %v211 = vadd.f32 %v136, %v207
    %s212 = sld [smem:[#allocation6 + $0x101]]
    %v213 = vstv %s212
    %v214 = vmul.f32 %v179, %v213
    %v217 = vunpack.c.l.s4 1983009808
    %v218 = vunpack.c.0.s8 %v217
    %v219 = vlaneseq
    %v220 = vshrl.u32 %v219, 7
    %v221 = vsub.s32 %v218, %v220
    %v222 = vrot.slane %v214, %v221
    %v223 = vcombine.high %v222, %v222
    %v226 = vadd.f32 %v156, %v222
    %v227 = vadd.f32 %v157, %v223
    %s228 = sld [smem:[#allocation6 + $0x181]]
    %v229 = vstv %s228
    %v230 = vmul.f32 %v179, %v229
    %v233 = vunpack.c.l.s4 1983009808
    %v234 = vunpack.c.0.s8 %v233
    %v235 = vlaneseq
    %v236 = vshrl.u32 %v235, 7
    %v237 = vsub.s32 %v234, %v236
    %v238 = vrot.slane %v230, %v237
    %v239 = vcombine.high %v238, %v238
    %v242 = vadd.f32 %v177, %v238
    %v243 = vadd.f32 %v178, %v239
    %v244 = vld [vmem:[#allocation2 + $0x8] sm:$0xf]
    %s245 = sld [smem:[#allocation6 + $0x2]]
    %v246 = vstv %s245
    %v247 = vmul.f32 %v244, %v246
    %v250 = vunpack.c.l.s4 1983009808
    %v251 = vunpack.c.0.s8 %v250
    %v252 = vlaneseq
    %v253 = vshrl.u32 %v252, 7
    %v254 = vsub.s32 %v251, %v253
    %v255 = vrot.slane %v247, %v254
    %v256 = vcombine.high %v255, %v255
    %v259 = vadd.f32 %v194, %v255
    %v260 = vadd.f32 %v195, %v256
    %s261 = sld [smem:[#allocation6 + $0x82]]
    %v262 = vstv %s261
    %v263 = vmul.f32 %v244, %v262
    %v266 = vunpack.c.l.s4 1983009808
    %v267 = vunpack.c.0.s8 %v266
    %v268 = vlaneseq
    %v269 = vshrl.u32 %v268, 7
    %v270 = vsub.s32 %v267, %v269
    %v271 = vrot.slane %v263, %v270
    %v272 = vcombine.high %v271, %v271
    %v275 = vadd.f32 %v210, %v271
    %v276 = vadd.f32 %v211, %v272
    %s277 = sld [smem:[#allocation6 + $0x102]]
    %v278 = vstv %s277
    %v279 = vmul.f32 %v244, %v278
    %v282 = vunpack.c.l.s4 1983009808
    %v283 = vunpack.c.0.s8 %v282
    %v284 = vlaneseq
    %v285 = vshrl.u32 %v284, 7
    %v286 = vsub.s32 %v283, %v285
    %v287 = vrot.slane %v279, %v286
    %v288 = vcombine.high %v287, %v287
    %v291 = vadd.f32 %v226, %v287
    %v292 = vadd.f32 %v227, %v288
    %s293 = sld [smem:[#allocation6 + $0x182]]
    %v294 = vstv %s293
    %v295 = vmul.f32 %v244, %v294
    %v298 = vunpack.c.l.s4 1983009808
    %v299 = vunpack.c.0.s8 %v298
    %v300 = vlaneseq
    %v301 = vshrl.u32 %v300, 7
    %v302 = vsub.s32 %v299, %v301
    %v303 = vrot.slane %v295, %v302
    %v304 = vcombine.high %v303, %v303
    %v307 = vadd.f32 %v242, %v303
    %v308 = vadd.f32 %v243, %v304
    %v309 = vld [vmem:[#allocation2 + $0xc] sm:$0xf]
    %s310 = sld [smem:[#allocation6 + $0x3]]
    %v311 = vstv %s310
    %v312 = vmul.f32 %v309, %v311
    %v315 = vunpack.c.l.s4 1983009808
    %v316 = vunpack.c.0.s8 %v315
    %v317 = vlaneseq
    %v318 = vshrl.u32 %v317, 7
    %v319 = vsub.s32 %v316, %v318
    %v320 = vrot.slane %v312, %v319
    %v321 = vcombine.high %v320, %v320
    %v324 = vadd.f32 %v259, %v320
    %v325 = vadd.f32 %v260, %v321
    %s326 = sld [smem:[#allocation6 + $0x83]]
    %v327 = vstv %s326
    %v328 = vmul.f32 %v309, %v327
    %v331 = vunpack.c.l.s4 1983009808
    %v332 = vunpack.c.0.s8 %v331
    %v333 = vlaneseq
    %v334 = vshrl.u32 %v333, 7
    %v335 = vsub.s32 %v332, %v334
    %v336 = vrot.slane %v328, %v335
    %v337 = vcombine.high %v336, %v336
    %v340 = vadd.f32 %v275, %v336
    %v341 = vadd.f32 %v276, %v337
    %s342 = sld [smem:[#allocation6 + $0x103]]
    %v343 = vstv %s342
    %v344 = vmul.f32 %v309, %v343
    %v347 = vunpack.c.l.s4 1983009808
    %v348 = vunpack.c.0.s8 %v347
    %v349 = vlaneseq
    %v350 = vshrl.u32 %v349, 7
    %v351 = vsub.s32 %v348, %v350
    %v352 = vrot.slane %v344, %v351
    %v353 = vcombine.high %v352, %v352
    %v356 = vadd.f32 %v291, %v352
    %v357 = vadd.f32 %v292, %v353
    %s358 = sld [smem:[#allocation6 + $0x183]]
    %v359 = vstv %s358
    %v360 = vmul.f32 %v309, %v359
    %v363 = vunpack.c.l.s4 1983009808
    %v364 = vunpack.c.0.s8 %v363
    %v365 = vlaneseq
    %v366 = vshrl.u32 %v365, 7
    %v367 = vsub.s32 %v364, %v366
    %v368 = vrot.slane %v360, %v367
    %v369 = vcombine.high %v368, %v368
    %v372 = vadd.f32 %v307, %v368
    %v373 = vadd.f32 %v308, %v369
    %v382 = vcombine.low %v324, %v325
    %v383 = vcombine.low %v340, %v341
    %v385 = vunpack.c.l.s4 1983009808
    %v386 = vunpack.c.0.s8 %v385
    %v387 = vlaneseq
    %v388 = vshrl.u32 %v387, 7
    %v389 = vsub.s32 %v386, %v388
    %v390 = vrot.slane %v382, %v389
    %v392 = vunpack.c.l.s4 1983009808
    %v393 = vunpack.c.0.s8 %v392
    %v394 = vlaneseq
    %v395 = vshrl.u32 %v394, 7
    %v396 = vsub.s32 %v393, %v395
    %v397 = vrot.slane %v383, %v396
    %v398 = vcombine.low %v390, %v397
    %v399 = vcombine.low %v356, %v357
    %v400 = vcombine.low %v372, %v373
    %v402 = vunpack.c.l.s4 1983009808
    %v403 = vunpack.c.0.s8 %v402
    %v404 = vlaneseq
    %v405 = vshrl.u32 %v404, 7
    %v406 = vsub.s32 %v403, %v405
    %v407 = vrot.slane %v399, %v406
    %v409 = vunpack.c.l.s4 1983009808
    %v410 = vunpack.c.0.s8 %v409
    %v411 = vlaneseq
    %v412 = vshrl.u32 %v411, 7
    %v413 = vsub.s32 %v410, %v412
    %v414 = vrot.slane %v400, %v413
    %v415 = vcombine.low %v407, %v414
    %418 = vst [vmem:[#allocation10] sm:$0xff] %v398
    %419 = vst [vmem:[#allocation10 + $0x8] sm:$0xff] %v415
    // Predicated region
    $region38: #{tpu_custom_call.1} parent=1 // pred_check
      _
    $region39: #{tpu_custom_call.1} parent=1 // pred_check_branch
      %421 = sbr.rel (0) target = $region41
    $region40: #{tpu_custom_call.1} parent=1 // pred_region
      %s423 = ssub.s32 256, 256
      %424 = vsyncadd [#allocation4], %s423
      %s426 = sshll.u32 [#allocation10], 4
      %s427 = int_to_ptr.vmem [resolvable:$true] %s426
      %429 = dma.vmem_to_hbm [thread:$0]  %s427, 256, %s5, [#allocation4]
    $region41: #{tpu_custom_call.1} parent=1 // pred_fallthru
      _
    // Predicated region
    $region42: #{tpu_custom_call.1} parent=1 // pred_check
      _
    $region43: #{tpu_custom_call.1} parent=1 // pred_check_branch
      %431 = sbr.rel (0) target = $region45
    $region44: #{tpu_custom_call.1} parent=1 // pred_region
      %432 = dma.done [#allocation4], 256
    $region45: #{tpu_custom_call.1} parent=1 // pred_fallthru
      _
    %433 = vsyncpa [#allocation3], 1
    %434 = vsyncpa [#allocation4], 1
    %435 = vsyncpa [#allocation5], 1
    %436 = vsyncpa [#allocation8], 1

</llo_original>
